<compile_context>
chip_gen: v7x
topology: tpu7x:2x2x1
jax: 0.10.0
libtpu: 0.0.40
codegen_flags: <defaults>
</compile_context>

<pallas_src>
import jax
import jax.numpy as jnp
from jax.experimental import pallas as pl
from jax.experimental.pallas import tpu as pltpu

K_IN = 28 * 28      # 784
K_PAD = 896         # 7 * 128 (lane-dense K for layer 1)
H1 = 128
H2 = 64
N_OUT = 10
N_PAD = 128         # lane-dense output width


def mlp_kernel(x_ref, w1_ref, b1_ref, w2_ref, b2_ref, w3_ref, b3_ref, o_ref):
    # x_ref: (TB, 896) bf16; w1: (896, 128) bf16; w2: (128, 64) bf16;
    # w3: (64, 128) bf16 (zero-padded); biases f32; o_ref: (TB, 128) f32.
    x = x_ref[...]

    h1 = jnp.dot(x, w1_ref[...], preferred_element_type=jnp.float32)
    h1 = jnp.maximum(h1 + b1_ref[...], 0.0)                     # ReLU, f32

    h2 = jnp.dot(h1.astype(jnp.bfloat16), w2_ref[...],
                 preferred_element_type=jnp.float32)
    h2 = jnp.maximum(h2 + b2_ref[...], 0.0)                     # ReLU, f32

    out = jnp.dot(h2.astype(jnp.bfloat16), w3_ref[...],
                  preferred_element_type=jnp.float32)
    o_ref[...] = (out + b3_ref[...]).astype(o_ref.dtype)


def mlp_forward(x, params):
    """x: (B, 1, 28, 28) float32 NCHW. Returns (B, 10) float32 logits."""
    w1, b1, w2, b2, w3, b3 = params
    B = x.shape[0]
    x_flat = x.reshape(B, K_IN)                 # nn.Flatten (row-major)

    # --- padding for clean lane layout (zeros => numerically exact) ---
    x_p = jnp.pad(x_flat, ((0, 0), (0, K_PAD - K_IN)))
    w1_p = jnp.pad(w1, ((0, K_PAD - K_IN), (0, 0)))
    w3_p = jnp.pad(w3, ((0, 0), (0, N_PAD - N_OUT)))
    b3_p = jnp.pad(b3, ((0, 0), (0, N_PAD - N_OUT)))

    # --- batch tiling: fill the MXU at large B, stay tight at small B ---
    TB = 256 if B >= 256 else max(8, pl.cdiv(B, 8) * 8)
    B_pad = pl.cdiv(B, TB) * TB
    if B_pad != B:
        x_p = jnp.pad(x_p, ((0, B_pad - B), (0, 0)))

    # --- bf16 inputs/weights (f32 accumulation inside the kernel) ---
    x_b = x_p.astype(jnp.bfloat16)
    w1_b = w1_p.astype(jnp.bfloat16)
    w2_b = w2.astype(jnp.bfloat16)
    w3_b = w3_p.astype(jnp.bfloat16)

    grid = (B_pad // TB,)
    const = lambda i: (0, 0)                    # weights/biases VMEM-resident

    flops = 2 * B_pad * (K_PAD * H1 + H1 * H2 + H2 * N_PAD)
    bytes_accessed = (
        x_b.size * 2 + w1_b.size * 2 + w2_b.size * 2 + w3_b.size * 2
        + b1.size * 4 + b2.size * 4 + b3_p.size * 4 + B_pad * N_PAD * 4
    )

    out_padded = pl.pallas_call(
        mlp_kernel,
        out_shape=jax.ShapeDtypeStruct((B_pad, N_PAD), jnp.float32),
        grid=grid,
        in_specs=[
            pl.BlockSpec((TB, K_PAD), lambda i: (i, 0)),     # x tiles: pipelined
            pl.BlockSpec((K_PAD, H1), const),                # w1
            pl.BlockSpec((1, H1), const),                    # b1
            pl.BlockSpec((H1, H2), const),                   # w2
            pl.BlockSpec((1, H2), const),                    # b2
            pl.BlockSpec((H2, N_PAD), const),                # w3 (padded)
            pl.BlockSpec((1, N_PAD), const),                 # b3 (padded)
        ],
        out_specs=pl.BlockSpec((TB, N_PAD), lambda i: (i, 0)),
        compiler_params=pltpu.CompilerParams(
            dimension_semantics=("parallel",)),
        cost_estimate=pl.CostEstimate(
            flops=flops, transcendentals=0, bytes_accessed=bytes_accessed),
    )(x_b, w1_b, b1, w2_b, b2, w3_b, b3_p)

    return out_padded[:B, :N_OUT]


def init_params(key):
    """Deterministic init; same shapes as the PyTorch module (weights stored
    transposed as (in, out) for the row-major matmul)."""
    dims = [(K_IN, H1), (H1, H2), (H2, N_OUT)]
    params = []
    for i, (fan_in, fan_out) in enumerate(dims):
        kw, kb = jax.random.split(jax.random.fold_in(key, i))
        bound = 1.0 / jnp.sqrt(fan_in)
        w = jax.random.uniform(kw, (fan_in, fan_out), jnp.float32, -bound, bound)
        b = jax.random.uniform(kb, (1, fan_out), jnp.float32, -bound, bound)
        params += [w, b]
    return tuple(params)


if __name__ == "__main__":
    key = jax.random.PRNGKey(0)
    kx, kp = jax.random.split(key)

    B = 8
    x = jax.random.normal(kx, (B, 1, 28, 28), dtype=jnp.float32)
    params = init_params(kp)

    out = mlp_forward(x, params)
    out = jax.block_until_ready(out)

    # Sanity check against a pure-JAX f32 reference (loosened tolerance for the
    # bf16 input/weight cast; accumulation is f32 in both paths).
    w1, b1, w2, b2, w3, b3 = params
    xf = x.reshape(B, -1)
    ref = jnp.maximum(xf @ w1 + b1, 0.0)
    ref = jnp.maximum(ref @ w2 + b2, 0.0)
    ref = ref @ w3 + b3
    assert out.shape == (B, N_OUT)
    assert jnp.allclose(out, ref, atol=2e-2, rtol=5e-2), (
        float(jnp.max(jnp.abs(out - ref))))

    print("KERNEL_OK")
</pallas_src>

<mosaic_0001>
module attributes {stable_mosaic.version = 11 : i64} {
  func.func @mlp_kernel(%arg0: i32, %arg1: memref<8x896xbf16, #tpu.memory_space<vmem>>, %arg2: memref<896x128xbf16, #tpu.memory_space<vmem>>, %arg3: memref<1x128xf32, #tpu.memory_space<vmem>>, %arg4: memref<128x64xbf16, #tpu.memory_space<vmem>>, %arg5: memref<1x64xf32, #tpu.memory_space<vmem>>, %arg6: memref<64x128xbf16, #tpu.memory_space<vmem>>, %arg7: memref<1x128xf32, #tpu.memory_space<vmem>>, %arg8: memref<8x128xf32, #tpu.memory_space<vmem>>) attributes {dimension_semantics = [#tpu.dimension_semantics<parallel>], iteration_bounds = array<i64: 1>, scalar_prefetch = 0 : i64, scratch_operands = 0 : i64, tpu.core_type = #tpu.core_type<tc>, window_params = [{transform_indices = @transform_0, window_bounds = array<i64: 8, 896>}, {pipeline_mode = #tpu.pipeline_mode<synchronous>, transform_indices = @transform_1, window_bounds = array<i64: 896, 128>}, {pipeline_mode = #tpu.pipeline_mode<synchronous>, transform_indices = @transform_2, window_bounds = array<i64: 1, 128>}, {pipeline_mode = #tpu.pipeline_mode<synchronous>, transform_indices = @transform_3, window_bounds = array<i64: 128, 64>}, {pipeline_mode = #tpu.pipeline_mode<synchronous>, transform_indices = @transform_4, window_bounds = array<i64: 1, 64>}, {pipeline_mode = #tpu.pipeline_mode<synchronous>, transform_indices = @transform_5, window_bounds = array<i64: 64, 128>}, {pipeline_mode = #tpu.pipeline_mode<synchronous>, transform_indices = @transform_6, window_bounds = array<i64: 1, 128>}, {transform_indices = @transform_7, window_bounds = array<i64: 8, 128>}]} {
    %c0 = arith.constant 0 : index
    %c0_0 = arith.constant 0 : index
    %0 = vector.load %arg1[%c0, %c0_0] : memref<8x896xbf16, #tpu.memory_space<vmem>>, vector<8x896xbf16>
    %c0_1 = arith.constant 0 : index
    %c0_2 = arith.constant 0 : index
    %1 = vector.load %arg2[%c0_1, %c0_2] : memref<896x128xbf16, #tpu.memory_space<vmem>>, vector<896x128xbf16>
    %cst = arith.constant dense<0.000000e+00> : vector<8x128xf32>
    %2 = tpu.matmul %0, %1, %cst {dimension_numbers = #tpu.dot_dimension_numbers<[1], [0], [0], [1], [0, 0, 1, 1], [], []>} : vector<8x896xbf16>, vector<896x128xbf16>, vector<8x128xf32> -> vector<8x128xf32>
    %c0_3 = arith.constant 0 : index
    %c0_4 = arith.constant 0 : index
    %3 = vector.load %arg3[%c0_3, %c0_4] : memref<1x128xf32, #tpu.memory_space<vmem>>, vector<1x128xf32>
    %4 = vector.broadcast %3 : vector<1x128xf32> to vector<8x128xf32>
    %5 = arith.addf %2, %4 : vector<8x128xf32>
    %cst_5 = arith.constant 0.000000e+00 : f32
    %6 = vector.broadcast %cst_5 : f32 to vector<8x128xf32>
    %7 = arith.maximumf %5, %6 : vector<8x128xf32>
    %8 = arith.truncf %7 : vector<8x128xf32> to vector<8x128xbf16>
    %c0_6 = arith.constant 0 : index
    %c0_7 = arith.constant 0 : index
    %9 = vector.load %arg4[%c0_6, %c0_7] : memref<128x64xbf16, #tpu.memory_space<vmem>>, vector<128x64xbf16>
    %cst_8 = arith.constant dense<0.000000e+00> : vector<8x64xf32>
    %10 = tpu.matmul %8, %9, %cst_8 {dimension_numbers = #tpu.dot_dimension_numbers<[1], [0], [0], [1], [0, 0, 1, 1], [], []>} : vector<8x128xbf16>, vector<128x64xbf16>, vector<8x64xf32> -> vector<8x64xf32>
    %c0_9 = arith.constant 0 : index
    %c0_10 = arith.constant 0 : index
    %11 = vector.load %arg5[%c0_9, %c0_10] : memref<1x64xf32, #tpu.memory_space<vmem>>, vector<1x64xf32>
    %12 = vector.broadcast %11 : vector<1x64xf32> to vector<8x64xf32>
    %13 = arith.addf %10, %12 : vector<8x64xf32>
    %cst_11 = arith.constant 0.000000e+00 : f32
    %14 = vector.broadcast %cst_11 : f32 to vector<8x64xf32>
    %15 = arith.maximumf %13, %14 : vector<8x64xf32>
    %16 = arith.truncf %15 : vector<8x64xf32> to vector<8x64xbf16>
    %c0_12 = arith.constant 0 : index
    %c0_13 = arith.constant 0 : index
    %17 = vector.load %arg6[%c0_12, %c0_13] : memref<64x128xbf16, #tpu.memory_space<vmem>>, vector<64x128xbf16>
    %cst_14 = arith.constant dense<0.000000e+00> : vector<8x128xf32>
    %18 = tpu.matmul %16, %17, %cst_14 {dimension_numbers = #tpu.dot_dimension_numbers<[1], [0], [0], [1], [0, 0, 1, 1], [], []>} : vector<8x64xbf16>, vector<64x128xbf16>, vector<8x128xf32> -> vector<8x128xf32>
    %c0_15 = arith.constant 0 : index
    %c0_16 = arith.constant 0 : index
    %19 = vector.load %arg7[%c0_15, %c0_16] : memref<1x128xf32, #tpu.memory_space<vmem>>, vector<1x128xf32>
    %20 = vector.broadcast %19 : vector<1x128xf32> to vector<8x128xf32>
    %21 = arith.addf %18, %20 : vector<8x128xf32>
    %c0_17 = arith.constant 0 : index
    %c0_18 = arith.constant 0 : index
    %22 = vector.load %arg8[%c0_17, %c0_18] : memref<8x128xf32, #tpu.memory_space<vmem>>, vector<8x128xf32>
    tpu.vector_store %arg8[%c0_17, %c0_18], %21 {strides = array<i32>} : memref<8x128xf32, #tpu.memory_space<vmem>>, vector<8x128xf32>,
    return
  }
  func.func @transform_0(%arg0: i32) -> (i32, i32) {
    %c0_i32 = arith.constant 0 : i32
    %c0_i32_0 = arith.constant 0 : i32
    return %arg0, %c0_i32 : i32, i32
  }
  func.func @transform_1(%arg0: i32) -> (i32, i32) {
    %c0_i32 = arith.constant 0 : i32
    %c0_i32_0 = arith.constant 0 : i32
    %c0_i32_1 = arith.constant 0 : i32
    return %c0_i32, %c0_i32_0 : i32, i32
  }
  func.func @transform_2(%arg0: i32) -> (i32, i32) {
    %c0_i32 = arith.constant 0 : i32
    %c0_i32_0 = arith.constant 0 : i32
    %c0_i32_1 = arith.constant 0 : i32
    return %c0_i32, %c0_i32_0 : i32, i32
  }
  func.func @transform_3(%arg0: i32) -> (i32, i32) {
    %c0_i32 = arith.constant 0 : i32
    %c0_i32_0 = arith.constant 0 : i32
    %c0_i32_1 = arith.constant 0 : i32
    return %c0_i32, %c0_i32_0 : i32, i32
  }
  func.func @transform_4(%arg0: i32) -> (i32, i32) {
    %c0_i32 = arith.constant 0 : i32
    %c0_i32_0 = arith.constant 0 : i32
    %c0_i32_1 = arith.constant 0 : i32
    return %c0_i32, %c0_i32_0 : i32, i32
  }
  func.func @transform_5(%arg0: i32) -> (i32, i32) {
    %c0_i32 = arith.constant 0 : i32
    %c0_i32_0 = arith.constant 0 : i32
    %c0_i32_1 = arith.constant 0 : i32
    return %c0_i32, %c0_i32_0 : i32, i32
  }
  func.func @transform_6(%arg0: i32) -> (i32, i32) {
    %c0_i32 = arith.constant 0 : i32
    %c0_i32_0 = arith.constant 0 : i32
    %c0_i32_1 = arith.constant 0 : i32
    return %c0_i32, %c0_i32_0 : i32, i32
  }
  func.func @transform_7(%arg0: i32) -> (i32, i32) {
    %c0_i32 = arith.constant 0 : i32
    %c0_i32_0 = arith.constant 0 : i32
    return %arg0, %c0_i32 : i32, i32
  }
}

</mosaic_0001>

<llo_original>
// kernel: tpu_custom_call.1
$region0: #{tpu_custom_call.1}
  #allocation0 [shape = 'u32[]', space=smem, size = 0x4, offset = 0x4, fixed_abs, tag = 'smem constant byte address 0x4 - core index']
  #allocation1 [shape = 'u32[144,128]{1,0:T(1,128)}', space=vmem, size = 0x12000, scoped, tag = 'internal scratch']
  %s0 = inlined_call_operand.vmem [shape: bf16[8,896], index: 0, kind: input, shape index: {}]
  %s1 = inlined_call_operand.hbm [shape: bf16[896,128], index: 1, kind: input, shape index: {}]
  %s2 = inlined_call_operand.vmem [shape: f32[1,128], index: 2, kind: input, shape index: {}]
  %s3 = inlined_call_operand.vmem [shape: bf16[128,64], index: 3, kind: input, shape index: {}]
  %s4 = inlined_call_operand.vmem [shape: f32[1,64], index: 4, kind: input, shape index: {}]
  %s5 = inlined_call_operand.vmem [shape: bf16[64,128], index: 5, kind: input, shape index: {}]
  %s6 = inlined_call_operand.vmem [shape: f32[1,128], index: 6, kind: input, shape index: {}]
  %s7 = inlined_call_operand.hbm [shape: f32[8,128], index: 7, kind: output, shape index: {}]
  %s8 = sld [smem:[#allocation0]]
  $region42: #{tpu_custom_call.1} parent=0
    _
  %s10 = ssub.s32 1, %s8
  %s11 = scalar_select 0, %s10, %s8
  $region1: #{tpu_custom_call.1} parent=0
    #allocation2 [shape = 'u8[229376]{0}', space=vmem, size = 0x38000, scoped, tag = 'input window, operand 1, single buffered']
    #allocation3 [shape = 's32[1]{0}', space=sflag, size = 0x4, scoped, tag = 'scoped memory for tpu_custom_call.1']
    #allocation4 [shape = 's32[1]{0}', space=sflag, size = 0x4, scoped, tag = 'scoped memory for tpu_custom_call.1']
    #allocation5 [shape = 'u8[4096]{0}', space=vmem, size = 0x1000, scoped, tag = 'output window, operand 0, single buffered']
    %12 = vsyncpa [#allocation3], 0
    %13 = vsyncpa [#allocation4], 0
    // Predicated region
    $region2: #{tpu_custom_call.1} parent=1 // pred_check
      _
    $region3: #{tpu_custom_call.1} parent=1 // pred_check_branch
      %15 = sbr.rel (0) target = $region5
    $region4: #{tpu_custom_call.1} parent=1 // pred_region
      _
    $region5: #{tpu_custom_call.1} parent=1 // pred_fallthru
      _
    // Predicated region
    $region6: #{tpu_custom_call.1} parent=1 // pred_check
      _
    $region7: #{tpu_custom_call.1} parent=1 // pred_check_branch
      %17 = sbr.rel (0) target = $region9
    $region8: #{tpu_custom_call.1} parent=1 // pred_region
      %s19 = ssub.s32 7168, 7168
      %20 = vsyncadd [#allocation3], %s19
      %s21 = sshll.u32 [#allocation2], 4
      %s22 = int_to_ptr.vmem [resolvable:$true] %s21
      %27 = dma.hbm_to_vmem [thread:$0]  %s1, 7168, %s22, [#allocation3], 64, 64, 4
    $region9: #{tpu_custom_call.1} parent=1 // pred_fallthru
      _
    // Predicated region
    $region10: #{tpu_custom_call.1} parent=1 // pred_check
      _
    $region11: #{tpu_custom_call.1} parent=1 // pred_check_branch
      %29 = sbr.rel (0) target = $region13
    $region12: #{tpu_custom_call.1} parent=1 // pred_region
      _
    $region13: #{tpu_custom_call.1} parent=1 // pred_fallthru
      _
    // Predicated region
    $region14: #{tpu_custom_call.1} parent=1 // pred_check
      _
    $region15: #{tpu_custom_call.1} parent=1 // pred_check_branch
      %31 = sbr.rel (0) target = $region17
    $region16: #{tpu_custom_call.1} parent=1 // pred_region
      _
    $region17: #{tpu_custom_call.1} parent=1 // pred_fallthru
      _
    // Predicated region
    $region18: #{tpu_custom_call.1} parent=1 // pred_check
      _
    $region19: #{tpu_custom_call.1} parent=1 // pred_check_branch
      %33 = sbr.rel (0) target = $region21
    $region20: #{tpu_custom_call.1} parent=1 // pred_region
      _
    $region21: #{tpu_custom_call.1} parent=1 // pred_fallthru
      _
    // Predicated region
    $region22: #{tpu_custom_call.1} parent=1 // pred_check
      _
    $region23: #{tpu_custom_call.1} parent=1 // pred_check_branch
      %35 = sbr.rel (0) target = $region25
    $region24: #{tpu_custom_call.1} parent=1 // pred_region
      _
    $region25: #{tpu_custom_call.1} parent=1 // pred_fallthru
      _
    // Predicated region
    $region26: #{tpu_custom_call.1} parent=1 // pred_check
      _
    $region27: #{tpu_custom_call.1} parent=1 // pred_check_branch
      %37 = sbr.rel (0) target = $region29
    $region28: #{tpu_custom_call.1} parent=1 // pred_region
      _
    $region29: #{tpu_custom_call.1} parent=1 // pred_fallthru
      _
    // Predicated region
    $region30: #{tpu_custom_call.1} parent=1 // pred_check
      _
    $region31: #{tpu_custom_call.1} parent=1 // pred_check_branch
      %39 = sbr.rel (0) target = $region33
    $region32: #{tpu_custom_call.1} parent=1 // pred_region
      %40 = dma.done [#allocation3], 7168
    $region33: #{tpu_custom_call.1} parent=1 // pred_fallthru
      _
    %v42 = vld [vmem:[%s0] sm:$0xff]
    %v43 = vld [vmem:[%s0 + $0x8] sm:$0xff]
    %v44 = vld [vmem:[%s0 + $0x10] sm:$0xff]
    %v45 = vld [vmem:[%s0 + $0x18] sm:$0xf]
    %v46 = vld [vmem:[#allocation2] sm:$0xf]
    %v47 = vld [vmem:[#allocation2 + $0x4] sm:$0xf]
    %v48 = vld [vmem:[#allocation2 + $0x8] sm:$0xf]
    %v49 = vld [vmem:[#allocation2 + $0xc] sm:$0xf]
    %v50 = vld [vmem:[#allocation2 + $0x10] sm:$0xf]
    %v51 = vld [vmem:[#allocation2 + $0x14] sm:$0xf]
    %v52 = vld [vmem:[#allocation2 + $0x18] sm:$0xf]
    %v53 = vld [vmem:[#allocation2 + $0x1c] sm:$0xf]
    %v54 = vld [vmem:[#allocation2 + $0x20] sm:$0xf]
    %v55 = vld [vmem:[#allocation2 + $0x24] sm:$0xf]
    %v56 = vld [vmem:[#allocation2 + $0x28] sm:$0xf]
    %v57 = vld [vmem:[#allocation2 + $0x2c] sm:$0xf]
    %v58 = vld [vmem:[#allocation2 + $0x30] sm:$0xf]
    %v59 = vld [vmem:[#allocation2 + $0x34] sm:$0xf]
    %v60 = vld [vmem:[#allocation2 + $0x38] sm:$0xf]
    %v61 = vld [vmem:[#allocation2 + $0x3c] sm:$0xf]
    %v62 = vld [vmem:[#allocation2 + $0x40] sm:$0xf]
    %v63 = vld [vmem:[#allocation2 + $0x44] sm:$0xf]
    %v64 = vld [vmem:[#allocation2 + $0x48] sm:$0xf]
    %v65 = vld [vmem:[#allocation2 + $0x4c] sm:$0xf]
    %v66 = vld [vmem:[#allocation2 + $0x50] sm:$0xf]
    %v67 = vld [vmem:[#allocation2 + $0x54] sm:$0xf]
    %v68 = vld [vmem:[#allocation2 + $0x58] sm:$0xf]
    %v69 = vld [vmem:[#allocation2 + $0x5c] sm:$0xf]
    %v70 = vld [vmem:[#allocation2 + $0x60] sm:$0xf]
    %v71 = vld [vmem:[#allocation2 + $0x64] sm:$0xf]
    %v72 = vld [vmem:[#allocation2 + $0x68] sm:$0xf]
    %v73 = vld [vmem:[#allocation2 + $0x6c] sm:$0xf]
    %v74 = vld [vmem:[#allocation2 + $0x70] sm:$0xf]
    %v75 = vld [vmem:[#allocation2 + $0x74] sm:$0xf]
    %v76 = vld [vmem:[#allocation2 + $0x78] sm:$0xf]
    %v77 = vld [vmem:[#allocation2 + $0x7c] sm:$0xf]
    %v78 = vld [vmem:[#allocation2 + $0x80] sm:$0xf]
    %v79 = vld [vmem:[#allocation2 + $0x84] sm:$0xf]
    %v80 = vld [vmem:[#allocation2 + $0x88] sm:$0xf]
    %v81 = vld [vmem:[#allocation2 + $0x8c] sm:$0xf]
    %v82 = vld [vmem:[#allocation2 + $0x90] sm:$0xf]
    %v83 = vld [vmem:[#allocation2 + $0x94] sm:$0xf]
    %v84 = vld [vmem:[#allocation2 + $0x98] sm:$0xf]
    %v85 = vld [vmem:[#allocation2 + $0x9c] sm:$0xf]
    %v86 = vld [vmem:[#allocation2 + $0xa0] sm:$0xf]
    %v87 = vld [vmem:[#allocation2 + $0xa4] sm:$0xf]
    %v88 = vld [vmem:[#allocation2 + $0xa8] sm:$0xf]
    %v89 = vld [vmem:[#allocation2 + $0xac] sm:$0xf]
    %v90 = vld [vmem:[#allocation2 + $0xb0] sm:$0xf]
    %v91 = vld [vmem:[#allocation2 + $0xb4] sm:$0xf]
    %v92 = vld [vmem:[#allocation2 + $0xb8] sm:$0xf]
    %v93 = vld [vmem:[#allocation2 + $0xbc] sm:$0xf]
    %v94 = vld [vmem:[#allocation2 + $0xc0] sm:$0xf]
    %v95 = vld [vmem:[#allocation2 + $0xc4] sm:$0xf]
    %v96 = vld [vmem:[#allocation2 + $0xc8] sm:$0xf]
    %v97 = vld [vmem:[#allocation2 + $0xcc] sm:$0xf]
    %v98 = vld [vmem:[#allocation2 + $0xd0] sm:$0xf]
    %v99 = vld [vmem:[#allocation2 + $0xd4] sm:$0xf]
    %v100 = vld [vmem:[#allocation2 + $0xd8] sm:$0xf]
    %v101 = vld [vmem:[#allocation2 + $0xdc] sm:$0xf]
    %v102 = vld [vmem:[#allocation2 + $0xe0] sm:$0xf]
    %v103 = vld [vmem:[#allocation2 + $0xe4] sm:$0xf]
    %v104 = vld [vmem:[#allocation2 + $0xe8] sm:$0xf]
    %v105 = vld [vmem:[#allocation2 + $0xec] sm:$0xf]
    %v106 = vld [vmem:[#allocation2 + $0xf0] sm:$0xf]
    %v107 = vld [vmem:[#allocation2 + $0xf4] sm:$0xf]
    %v108 = vld [vmem:[#allocation2 + $0xf8] sm:$0xf]
    %v109 = vld [vmem:[#allocation2 + $0xfc] sm:$0xf]
    %v110 = vld [vmem:[#allocation2 + $0x100] sm:$0xf]
    %v111 = vld [vmem:[#allocation2 + $0x104] sm:$0xf]
    %v112 = vld [vmem:[#allocation2 + $0x108] sm:$0xf]
    %v113 = vld [vmem:[#allocation2 + $0x10c] sm:$0xf]
    %v114 = vld [vmem:[#allocation2 + $0x110] sm:$0xf]
    %v115 = vld [vmem:[#allocation2 + $0x114] sm:$0xf]
    %v116 = vld [vmem:[#allocation2 + $0x118] sm:$0xf]
    %v117 = vld [vmem:[#allocation2 + $0x11c] sm:$0xf]
    %v118 = vld [vmem:[#allocation2 + $0x120] sm:$0xf]
    %v119 = vld [vmem:[#allocation2 + $0x124] sm:$0xf]
    %v120 = vld [vmem:[#allocation2 + $0x128] sm:$0xf]
    %v121 = vld [vmem:[#allocation2 + $0x12c] sm:$0xf]
    %v122 = vld [vmem:[#allocation2 + $0x130] sm:$0xf]
    %v123 = vld [vmem:[#allocation2 + $0x134] sm:$0xf]
    %v124 = vld [vmem:[#allocation2 + $0x138] sm:$0xf]
    %v125 = vld [vmem:[#allocation2 + $0x13c] sm:$0xf]
    %v126 = vld [vmem:[#allocation2 + $0x140] sm:$0xf]
    %v127 = vld [vmem:[#allocation2 + $0x144] sm:$0xf]
    %v128 = vld [vmem:[#allocation2 + $0x148] sm:$0xf]
    %v129 = vld [vmem:[#allocation2 + $0x14c] sm:$0xf]
    %v130 = vld [vmem:[#allocation2 + $0x150] sm:$0xf]
    %v131 = vld [vmem:[#allocation2 + $0x154] sm:$0xf]
    %v132 = vld [vmem:[#allocation2 + $0x158] sm:$0xf]
    %v133 = vld [vmem:[#allocation2 + $0x15c] sm:$0xf]
    %v134 = vld [vmem:[#allocation2 + $0x160] sm:$0xf]
    %v135 = vld [vmem:[#allocation2 + $0x164] sm:$0xf]
    %v136 = vld [vmem:[#allocation2 + $0x168] sm:$0xf]
    %v137 = vld [vmem:[#allocation2 + $0x16c] sm:$0xf]
    %v138 = vld [vmem:[#allocation2 + $0x170] sm:$0xf]
    %v139 = vld [vmem:[#allocation2 + $0x174] sm:$0xf]
    %v140 = vld [vmem:[#allocation2 + $0x178] sm:$0xf]
    %v141 = vld [vmem:[#allocation2 + $0x17c] sm:$0xf]
    %v142 = vld [vmem:[#allocation2 + $0x180] sm:$0xf]
    %v143 = vld [vmem:[#allocation2 + $0x184] sm:$0xf]
    %v144 = vld [vmem:[#allocation2 + $0x188] sm:$0xf]
    %v145 = vld [vmem:[#allocation2 + $0x18c] sm:$0xf]
    %v146 = vld [vmem:[#allocation2 + $0x190] sm:$0xf]
    %v147 = vld [vmem:[#allocation2 + $0x194] sm:$0xf]
    %v148 = vld [vmem:[#allocation2 + $0x198] sm:$0xf]
    %v149 = vld [vmem:[#allocation2 + $0x19c] sm:$0xf]
    %v150 = vld [vmem:[#allocation2 + $0x1a0] sm:$0xf]
    %v151 = vld [vmem:[#allocation2 + $0x1a4] sm:$0xf]
    %v152 = vld [vmem:[#allocation2 + $0x1a8] sm:$0xf]
    %v153 = vld [vmem:[#allocation2 + $0x1ac] sm:$0xf]
    %v154 = vld [vmem:[#allocation2 + $0x1b0] sm:$0xf]
    %v155 = vld [vmem:[#allocation2 + $0x1b4] sm:$0xf]
    %v156 = vld [vmem:[#allocation2 + $0x1b8] sm:$0xf]
    %v157 = vld [vmem:[#allocation2 + $0x1bc] sm:$0xf]
    %v158 = vld [vmem:[%s2] sm:$0x1]
    %v160 = vlaneseq
    %v161 = vshrl.u32 %v160, 7
    %v162 = vsub.s32 0, %v161
    %v163 = vrot.slane %v158, %v162
    %v169 = vunpack.c.l.b16 %v42
    %v170 = vunpack.c.h.b16 %v42
    %v171 = vunpack.c.l.b16 %v43
    %v172 = vunpack.c.h.b16 %v43
    %v173 = vunpack.c.l.b16 %v44
    %v174 = vunpack.c.h.b16 %v44
    %v175 = vunpack.c.l.b16 %v45
    %v176 = vpack.c.b16 %v169, %v169
    %v177 = vpack.c.b16 %v170, %v170
    %v178 = vpack.c.b16 %v171, %v171
    %v179 = vpack.c.b16 %v172, %v172
    %v180 = vpack.c.b16 %v173, %v173
    %v181 = vpack.c.b16 %v174, %v174
    %v182 = vpack.c.b16 %v175, %v175
    %v302 = vunpack.c.l.b16 %v46
    %v303 = vunpack.c.l.b16 %v47
    %v304 = vunpack.c.l.b16 %v48
    %v305 = vunpack.c.l.b16 %v49
    %v306 = vunpack.c.l.b16 %v50
    %v307 = vunpack.c.l.b16 %v51
    %v308 = vunpack.c.l.b16 %v52
    %v309 = vunpack.c.l.b16 %v53
    %v310 = vunpack.c.l.b16 %v54
    %v311 = vunpack.c.l.b16 %v55
    %v312 = vunpack.c.l.b16 %v56
    %v313 = vunpack.c.l.b16 %v57
    %v314 = vunpack.c.l.b16 %v58
    %v315 = vunpack.c.l.b16 %v59
    %v316 = vunpack.c.l.b16 %v60
    %v317 = vunpack.c.l.b16 %v61
    %v318 = vunpack.c.l.b16 %v62
    %v319 = vunpack.c.l.b16 %v63
    %v320 = vunpack.c.l.b16 %v64
    %v321 = vunpack.c.l.b16 %v65
    %v322 = vunpack.c.l.b16 %v66
    %v323 = vunpack.c.l.b16 %v67
    %v324 = vunpack.c.l.b16 %v68
    %v325 = vunpack.c.l.b16 %v69
    %v326 = vunpack.c.l.b16 %v70
    %v327 = vunpack.c.l.b16 %v71
    %v328 = vunpack.c.l.b16 %v72
    %v329 = vunpack.c.l.b16 %v73
    %v330 = vunpack.c.l.b16 %v74
    %v331 = vunpack.c.l.b16 %v75
    %v332 = vunpack.c.l.b16 %v76
    %v333 = vunpack.c.l.b16 %v77
    %v334 = vunpack.c.l.b16 %v78
    %v335 = vunpack.c.l.b16 %v79
    %v336 = vunpack.c.l.b16 %v80
    %v337 = vunpack.c.l.b16 %v81
    %v338 = vunpack.c.l.b16 %v82
    %v339 = vunpack.c.l.b16 %v83
    %v340 = vunpack.c.l.b16 %v84
    %v341 = vunpack.c.l.b16 %v85
    %v342 = vunpack.c.l.b16 %v86
    %v343 = vunpack.c.l.b16 %v87
    %v344 = vunpack.c.l.b16 %v88
    %v345 = vunpack.c.l.b16 %v89
    %v346 = vunpack.c.l.b16 %v90
    %v347 = vunpack.c.l.b16 %v91
    %v348 = vunpack.c.l.b16 %v92
    %v349 = vunpack.c.l.b16 %v93
    %v350 = vunpack.c.l.b16 %v94
    %v351 = vunpack.c.l.b16 %v95
    %v352 = vunpack.c.l.b16 %v96
    %v353 = vunpack.c.l.b16 %v97
    %v354 = vunpack.c.l.b16 %v98
    %v355 = vunpack.c.l.b16 %v99
    %v356 = vunpack.c.l.b16 %v100
    %v357 = vunpack.c.l.b16 %v101
    %v358 = vunpack.c.l.b16 %v102
    %v359 = vunpack.c.l.b16 %v103
    %v360 = vunpack.c.l.b16 %v104
    %v361 = vunpack.c.l.b16 %v105
    %v362 = vunpack.c.l.b16 %v106
    %v363 = vunpack.c.l.b16 %v107
    %v364 = vunpack.c.l.b16 %v108
    %v365 = vunpack.c.l.b16 %v109
    %v366 = vunpack.c.l.b16 %v110
    %v367 = vunpack.c.l.b16 %v111
    %v368 = vunpack.c.l.b16 %v112
    %v369 = vunpack.c.l.b16 %v113
    %v370 = vunpack.c.l.b16 %v114
    %v371 = vunpack.c.l.b16 %v115
    %v372 = vunpack.c.l.b16 %v116
    %v373 = vunpack.c.l.b16 %v117
    %v374 = vunpack.c.l.b16 %v118
    %v375 = vunpack.c.l.b16 %v119
    %v376 = vunpack.c.l.b16 %v120
    %v377 = vunpack.c.l.b16 %v121
    %v378 = vunpack.c.l.b16 %v122
    %v379 = vunpack.c.l.b16 %v123
    %v380 = vunpack.c.l.b16 %v124
    %v381 = vunpack.c.l.b16 %v125
    %v382 = vunpack.c.l.b16 %v126
    %v383 = vunpack.c.l.b16 %v127
    %v384 = vunpack.c.l.b16 %v128
    %v385 = vunpack.c.l.b16 %v129
    %v386 = vunpack.c.l.b16 %v130
    %v387 = vunpack.c.l.b16 %v131
    %v388 = vunpack.c.l.b16 %v132
    %v389 = vunpack.c.l.b16 %v133
    %v390 = vunpack.c.l.b16 %v134
    %v391 = vunpack.c.l.b16 %v135
    %v392 = vunpack.c.l.b16 %v136
    %v393 = vunpack.c.l.b16 %v137
    %v394 = vunpack.c.l.b16 %v138
    %v395 = vunpack.c.l.b16 %v139
    %v396 = vunpack.c.l.b16 %v140
    %v397 = vunpack.c.l.b16 %v141
    %v398 = vunpack.c.l.b16 %v142
    %v399 = vunpack.c.l.b16 %v143
    %v400 = vunpack.c.l.b16 %v144
    %v401 = vunpack.c.l.b16 %v145
    %v402 = vunpack.c.l.b16 %v146
    %v403 = vunpack.c.l.b16 %v147
    %v404 = vunpack.c.l.b16 %v148
    %v405 = vunpack.c.l.b16 %v149
    %v406 = vunpack.c.l.b16 %v150
    %v407 = vunpack.c.l.b16 %v151
    %v408 = vunpack.c.l.b16 %v152
    %v409 = vunpack.c.l.b16 %v153
    %v410 = vunpack.c.l.b16 %v154
    %v411 = vunpack.c.l.b16 %v155
    %v412 = vunpack.c.l.b16 %v156
    %v413 = vunpack.c.l.b16 %v157
    %v414 = vpack.c.b16 %v303, %v302
    %v415 = vpack.c.b16 %v305, %v304
    %v416 = vpack.c.b16 %v307, %v306
    %v417 = vpack.c.b16 %v309, %v308
    %v418 = vpack.c.b16 %v311, %v310
    %v419 = vpack.c.b16 %v313, %v312
    %v420 = vpack.c.b16 %v315, %v314
    %v421 = vpack.c.b16 %v317, %v316
    %v422 = vpack.c.b16 %v319, %v318
    %v423 = vpack.c.b16 %v321, %v320
    %v424 = vpack.c.b16 %v323, %v322
    %v425 = vpack.c.b16 %v325, %v324
    %v426 = vpack.c.b16 %v327, %v326
    %v427 = vpack.c.b16 %v329, %v328
    %v428 = vpack.c.b16 %v331, %v330
    %v429 = vpack.c.b16 %v333, %v332
    %v430 = vpack.c.b16 %v335, %v334
    %v431 = vpack.c.b16 %v337, %v336
    %v432 = vpack.c.b16 %v339, %v338
    %v433 = vpack.c.b16 %v341, %v340
    %v434 = vpack.c.b16 %v343, %v342
    %v435 = vpack.c.b16 %v345, %v344
    %v436 = vpack.c.b16 %v347, %v346
    %v437 = vpack.c.b16 %v349, %v348
    %v438 = vpack.c.b16 %v351, %v350
    %v439 = vpack.c.b16 %v353, %v352
    %v440 = vpack.c.b16 %v355, %v354
    %v441 = vpack.c.b16 %v357, %v356
    %v442 = vpack.c.b16 %v359, %v358
    %v443 = vpack.c.b16 %v361, %v360
    %v444 = vpack.c.b16 %v363, %v362
    %v445 = vpack.c.b16 %v365, %v364
    %v446 = vpack.c.b16 %v367, %v366
    %v447 = vpack.c.b16 %v369, %v368
    %v448 = vpack.c.b16 %v371, %v370
    %v449 = vpack.c.b16 %v373, %v372
    %v450 = vpack.c.b16 %v375, %v374
    %v451 = vpack.c.b16 %v377, %v376
    %v452 = vpack.c.b16 %v379, %v378
    %v453 = vpack.c.b16 %v381, %v380
    %v454 = vpack.c.b16 %v383, %v382
    %v455 = vpack.c.b16 %v385, %v384
    %v456 = vpack.c.b16 %v387, %v386
    %v457 = vpack.c.b16 %v389, %v388
    %v458 = vpack.c.b16 %v391, %v390
    %v459 = vpack.c.b16 %v393, %v392
    %v460 = vpack.c.b16 %v395, %v394
    %v461 = vpack.c.b16 %v397, %v396
    %v462 = vpack.c.b16 %v399, %v398
    %v463 = vpack.c.b16 %v401, %v400
    %v464 = vpack.c.b16 %v403, %v402
    %v465 = vpack.c.b16 %v405, %v404
    %v466 = vpack.c.b16 %v407, %v406
    %v467 = vpack.c.b16 %v409, %v408
    %v468 = vpack.c.b16 %v411, %v410
    %v469 = vpack.c.b16 %v413, %v412
    %526 = vmatprep.subr.bf16.mxu0 0
    %527 = vmatpush1.bf16.msra.mxu0 %v414
    %528 = vmatprep.subr.bf16.mxu0 0
    %529 = vmatpush1.bf16.msra.mxu0 %v415
    %530 = vmatprep.subr.bf16.mxu0 0
    %531 = vmatpush1.bf16.msra.mxu0 %v416
    %532 = vmatprep.subr.bf16.mxu0 0
    %533 = vmatpush1.bf16.msra.mxu0 %v417
    %534 = vmatprep.subr.bf16.mxu0 0
    %535 = vmatpush1.bf16.msra.mxu0 %v418
    %536 = vmatprep.subr.bf16.mxu0 0
    %537 = vmatpush1.bf16.msra.mxu0 %v419
    %538 = vmatprep.subr.bf16.mxu0 0
    %539 = vmatpush1.bf16.msra.mxu0 %v420
    %540 = vmatprep.subr.bf16.mxu0 0
    %541 = vmatpush1.bf16.msra.mxu0 %v421
    %542 = vmatprep.subr.bf16.mxu0 0
    %543 = vmatpush1.bf16.msra.mxu0 %v422
    %544 = vmatprep.subr.bf16.mxu0 0
    %545 = vmatpush1.bf16.msra.mxu0 %v423
    %546 = vmatprep.subr.bf16.mxu0 0
    %547 = vmatpush1.bf16.msra.mxu0 %v424
    %548 = vmatprep.subr.bf16.mxu0 0
    %549 = vmatpush1.bf16.msra.mxu0 %v425
    %550 = vmatprep.subr.bf16.mxu0 0
    %551 = vmatpush1.bf16.msra.mxu0 %v426
    %552 = vmatprep.subr.bf16.mxu0 0
    %553 = vmatpush1.bf16.msra.mxu0 %v427
    %554 = vmatprep.subr.bf16.mxu0 0
    %555 = vmatpush1.bf16.msra.mxu0 %v428
    %556 = vmatprep.subr.bf16.mxu0 0
    %557 = vmatpush1.bf16.msra.mxu0 %v429
    %558 = vmatprep.mubr.bf16.mxu0 %v177
    %559 = vmatmul.mubr.bf16.gmra.mrb[0].mxu0 %v176
    %v560 = vpop.f32.mrb[0].mxu0
    %v561 = vadd.f32 %v163, %v560
    %v562 = vpop.f32.mrb[0].mxu0
    %v563 = vpop.f32.mrb[0].mxu0
    %v564 = vpop.f32.mrb[0].mxu0
    %565 = vdwg.mxu0
    %566 = vmatprep.subr.bf16.mxu0 0
    %567 = vmatpush1.bf16.msra.mxu0 %v430
    %568 = vmatprep.subr.bf16.mxu0 0
    %569 = vmatpush1.bf16.msra.mxu0 %v431
    %570 = vmatprep.subr.bf16.mxu0 0
    %571 = vmatpush1.bf16.msra.mxu0 %v432
    %572 = vmatprep.subr.bf16.mxu0 0
    %573 = vmatpush1.bf16.msra.mxu0 %v433
    %574 = vmatprep.subr.bf16.mxu0 0
    %575 = vmatpush1.bf16.msra.mxu0 %v434
    %576 = vmatprep.subr.bf16.mxu0 0
    %577 = vmatpush1.bf16.msra.mxu0 %v435
    %578 = vmatprep.subr.bf16.mxu0 0
    %579 = vmatpush1.bf16.msra.mxu0 %v436
    %580 = vmatprep.subr.bf16.mxu0 0
    %581 = vmatpush1.bf16.msra.mxu0 %v437
    %582 = vmatprep.subr.bf16.mxu0 0
    %583 = vmatpush1.bf16.msra.mxu0 %v438
    %584 = vmatprep.subr.bf16.mxu0 0
    %585 = vmatpush1.bf16.msra.mxu0 %v439
    %586 = vmatprep.subr.bf16.mxu0 0
    %587 = vmatpush1.bf16.msra.mxu0 %v440
    %588 = vmatprep.subr.bf16.mxu0 0
    %589 = vmatpush1.bf16.msra.mxu0 %v441
    %590 = vmatprep.subr.bf16.mxu0 0
    %591 = vmatpush1.bf16.msra.mxu0 %v442
    %592 = vmatprep.subr.bf16.mxu0 0
    %593 = vmatpush1.bf16.msra.mxu0 %v443
    %594 = vmatprep.subr.bf16.mxu0 0
    %595 = vmatpush1.bf16.msra.mxu0 %v444
    %596 = vmatprep.subr.bf16.mxu0 0
    %597 = vmatpush1.bf16.msra.mxu0 %v445
    %598 = vmatprep.mubr.bf16.mxu0 %v179
    %599 = vmatmul.mubr.bf16.gmra.mrb[0].mxu0 %v178
    %v600 = vpop.f32.mrb[0].mxu0
    %v601 = vadd.f32 %v561, %v600
    %v602 = vpop.f32.mrb[0].mxu0
    %v603 = vpop.f32.mrb[0].mxu0
    %v604 = vpop.f32.mrb[0].mxu0
    %605 = vdwg.mxu0
    %606 = vmatprep.subr.bf16.mxu0 0
    %607 = vmatpush1.bf16.msra.mxu0 %v446
    %608 = vmatprep.subr.bf16.mxu0 0
    %609 = vmatpush1.bf16.msra.mxu0 %v447
    %610 = vmatprep.subr.bf16.mxu0 0
    %611 = vmatpush1.bf16.msra.mxu0 %v448
    %612 = vmatprep.subr.bf16.mxu0 0
    %613 = vmatpush1.bf16.msra.mxu0 %v449
    %614 = vmatprep.subr.bf16.mxu0 0
    %615 = vmatpush1.bf16.msra.mxu0 %v450
    %616 = vmatprep.subr.bf16.mxu0 0
    %617 = vmatpush1.bf16.msra.mxu0 %v451
    %618 = vmatprep.subr.bf16.mxu0 0
    %619 = vmatpush1.bf16.msra.mxu0 %v452
    %620 = vmatprep.subr.bf16.mxu0 0
    %621 = vmatpush1.bf16.msra.mxu0 %v453
    %622 = vmatprep.subr.bf16.mxu0 0
    %623 = vmatpush1.bf16.msra.mxu0 %v454
    %624 = vmatprep.subr.bf16.mxu0 0
    %625 = vmatpush1.bf16.msra.mxu0 %v455
    %626 = vmatprep.subr.bf16.mxu0 0
    %627 = vmatpush1.bf16.msra.mxu0 %v456
    %628 = vmatprep.subr.bf16.mxu0 0
    %629 = vmatpush1.bf16.msra.mxu0 %v457
    %630 = vmatprep.subr.bf16.mxu0 0
    %631 = vmatpush1.bf16.msra.mxu0 %v458
    %632 = vmatprep.subr.bf16.mxu0 0
    %633 = vmatpush1.bf16.msra.mxu0 %v459
    %634 = vmatprep.subr.bf16.mxu0 0
    %635 = vmatpush1.bf16.msra.mxu0 %v460
    %636 = vmatprep.subr.bf16.mxu0 0
    %637 = vmatpush1.bf16.msra.mxu0 %v461
    %638 = vmatprep.mubr.bf16.mxu0 %v181
    %639 = vmatmul.mubr.bf16.gmra.mrb[0].mxu0 %v180
    %v640 = vpop.f32.mrb[0].mxu0
    %v641 = vadd.f32 %v601, %v640
    %v642 = vpop.f32.mrb[0].mxu0
    %v643 = vpop.f32.mrb[0].mxu0
    %v644 = vpop.f32.mrb[0].mxu0
    %645 = vdwg.mxu0
    %646 = vmatprep.subr.bf16.mxu0 0
    %647 = vmatpush1.bf16.msra.mxu0 %v462
    %648 = vmatprep.subr.bf16.mxu0 0
    %649 = vmatpush1.bf16.msra.mxu0 %v463
    %650 = vmatprep.subr.bf16.mxu0 0
    %651 = vmatpush1.bf16.msra.mxu0 %v464
    %652 = vmatprep.subr.bf16.mxu0 0
    %653 = vmatpush1.bf16.msra.mxu0 %v465
    %654 = vmatprep.subr.bf16.mxu0 0
    %655 = vmatpush1.bf16.msra.mxu0 %v466
    %656 = vmatprep.subr.bf16.mxu0 0
    %657 = vmatpush1.bf16.msra.mxu0 %v467
    %658 = vmatprep.subr.bf16.mxu0 0
    %659 = vmatpush1.bf16.msra.mxu0 %v468
    %660 = vmatprep.subr.bf16.mxu0 0
    %661 = vmatpush1.bf16.msra.mxu0 %v469
    %662 = vmatprep.subr.bf16.mxu0 0
    %663 = vmatpush1.bf16.msra.mxu0 0
    %664 = vmatprep.subr.bf16.mxu0 0
    %665 = vmatpush1.bf16.msra.mxu0 0
    %666 = vmatprep.subr.bf16.mxu0 0
    %667 = vmatpush1.bf16.msra.mxu0 0
    %668 = vmatprep.subr.bf16.mxu0 0
    %669 = vmatpush1.bf16.msra.mxu0 0
    %670 = vmatprep.subr.bf16.mxu0 0
    %671 = vmatpush1.bf16.msra.mxu0 0
    %672 = vmatprep.subr.bf16.mxu0 0
    %673 = vmatpush1.bf16.msra.mxu0 0
    %674 = vmatprep.subr.bf16.mxu0 0
    %675 = vmatpush1.bf16.msra.mxu0 0
    %676 = vmatprep.subr.bf16.mxu0 0
    %677 = vmatpush1.bf16.msra.mxu0 0
    %678 = vmatprep.mubr.bf16.mxu0 0
    %679 = vmatmul.mubr.bf16.gmra.mrb[0].mxu0 %v182
    %v680 = vpop.f32.mrb[0].mxu0
    %v681 = vadd.f32 %v641, %v680
    %v682 = vpop.f32.mrb[0].mxu0
    %v683 = vpop.f32.mrb[0].mxu0
    %v684 = vpop.f32.mrb[0].mxu0
    %685 = vdwg.mxu0
    %v686 = vmax.f32 %v681, 0.0
    %v687 = vpack.c.bf16 %v686, %v686
    %v688 = vld [vmem:[%s3] sm:$0xf]
    %v689 = vld [vmem:[%s3 + $0x4] sm:$0xf]
    %v690 = vld [vmem:[%s3 + $0x8] sm:$0xf]
    %v691 = vld [vmem:[%s3 + $0xc] sm:$0xf]
    %v692 = vld [vmem:[%s3 + $0x10] sm:$0xf]
    %v693 = vld [vmem:[%s3 + $0x14] sm:$0xf]
    %v694 = vld [vmem:[%s3 + $0x18] sm:$0xf]
    %v695 = vld [vmem:[%s3 + $0x1c] sm:$0xf]
    %v696 = vld [vmem:[%s3 + $0x20] sm:$0xf]
    %v697 = vld [vmem:[%s3 + $0x24] sm:$0xf]
    %v698 = vld [vmem:[%s3 + $0x28] sm:$0xf]
    %v699 = vld [vmem:[%s3 + $0x2c] sm:$0xf]
    %v700 = vld [vmem:[%s3 + $0x30] sm:$0xf]
    %v701 = vld [vmem:[%s3 + $0x34] sm:$0xf]
    %v702 = vld [vmem:[%s3 + $0x38] sm:$0xf]
    %v703 = vld [vmem:[%s3 + $0x3c] sm:$0xf]
    %v704 = vld [vmem:[%s4] sm:$0x1]
    %v706 = vlaneseq
    %v707 = vshrl.u32 %v706, 7
    %v708 = vsub.s32 0, %v707
    %v709 = vrot.slane %v704, %v708
    %v727 = vunpack.c.l.b16 %v688
    %v728 = vunpack.c.l.b16 %v689
    %v729 = vunpack.c.l.b16 %v690
    %v730 = vunpack.c.l.b16 %v691
    %v731 = vunpack.c.l.b16 %v692
    %v732 = vunpack.c.l.b16 %v693
    %v733 = vunpack.c.l.b16 %v694
    %v734 = vunpack.c.l.b16 %v695
    %v735 = vunpack.c.l.b16 %v696
    %v736 = vunpack.c.l.b16 %v697
    %v737 = vunpack.c.l.b16 %v698
    %v738 = vunpack.c.l.b16 %v699
    %v739 = vunpack.c.l.b16 %v700
    %v740 = vunpack.c.l.b16 %v701
    %v741 = vunpack.c.l.b16 %v702
    %v742 = vunpack.c.l.b16 %v703
    %v743 = vpack.c.b16 %v728, %v727
    %v744 = vpack.c.b16 %v730, %v729
    %v745 = vpack.c.b16 %v732, %v731
    %v746 = vpack.c.b16 %v734, %v733
    %v747 = vpack.c.b16 %v736, %v735
    %v748 = vpack.c.b16 %v738, %v737
    %v749 = vpack.c.b16 %v740, %v739
    %v750 = vpack.c.b16 %v742, %v741
    %759 = vmatprep.subr.bf16.mxu0 0
    %760 = vmatpush1.bf16.msra.mxu0 %v743
    %761 = vmatprep.subr.bf16.mxu0 0
    %762 = vmatpush1.bf16.msra.mxu0 %v744
    %763 = vmatprep.subr.bf16.mxu0 0
    %764 = vmatpush1.bf16.msra.mxu0 %v745
    %765 = vmatprep.subr.bf16.mxu0 0
    %766 = vmatpush1.bf16.msra.mxu0 %v746
    %767 = vmatprep.subr.bf16.mxu0 0
    %768 = vmatpush1.bf16.msra.mxu0 %v747
    %769 = vmatprep.subr.bf16.mxu0 0
    %770 = vmatpush1.bf16.msra.mxu0 %v748
    %771 = vmatprep.subr.bf16.mxu0 0
    %772 = vmatpush1.bf16.msra.mxu0 %v749
    %773 = vmatprep.subr.bf16.mxu0 0
    %774 = vmatpush1.bf16.msra.mxu0 %v750
    %775 = vmatprep.subr.bf16.mxu0 0
    %776 = vmatpush1.bf16.msra.mxu0 0
    %777 = vmatprep.subr.bf16.mxu0 0
    %778 = vmatpush1.bf16.msra.mxu0 0
    %779 = vmatprep.subr.bf16.mxu0 0
    %780 = vmatpush1.bf16.msra.mxu0 0
    %781 = vmatprep.subr.bf16.mxu0 0
    %782 = vmatpush1.bf16.msra.mxu0 0
    %783 = vmatprep.subr.bf16.mxu0 0
    %784 = vmatpush1.bf16.msra.mxu0 0
    %785 = vmatprep.subr.bf16.mxu0 0
    %786 = vmatpush1.bf16.msra.mxu0 0
    %787 = vmatprep.subr.bf16.mxu0 0
    %788 = vmatpush1.bf16.msra.mxu0 0
    %789 = vmatprep.subr.bf16.mxu0 0
    %790 = vmatpush1.bf16.msra.mxu0 0
    %791 = vmatprep.mubr.bf16.mxu0 0
    %792 = vmatmul.mubr.bf16.gmra.mrb[0].mxu0 %v687
    %v793 = vpop.f32.mrb[0].mxu0
    %v794 = vadd.f32 %v709, %v793
    %v795 = vpop.f32.mrb[0].mxu0
    %v796 = vpop.f32.mrb[0].mxu0
    %v797 = vpop.f32.mrb[0].mxu0
    %798 = vdwg.mxu0
    %v799 = vmax.f32 %v794, 0.0
    %v800 = vpack.c.bf16 %v799, %v799
    %v801 = vld [vmem:[%s5] sm:$0xf]
    %v802 = vld [vmem:[%s5 + $0x4] sm:$0xf]
    %v803 = vld [vmem:[%s5 + $0x8] sm:$0xf]
    %v804 = vld [vmem:[%s5 + $0xc] sm:$0xf]
    %v805 = vld [vmem:[%s5 + $0x10] sm:$0xf]
    %v806 = vld [vmem:[%s5 + $0x14] sm:$0xf]
    %v807 = vld [vmem:[%s5 + $0x18] sm:$0xf]
    %v808 = vld [vmem:[%s5 + $0x1c] sm:$0xf]
    %v809 = vld [vmem:[%s6] sm:$0x1]
    %v811 = vlaneseq
    %v812 = vshrl.u32 %v811, 7
    %v813 = vsub.s32 0, %v812
    %v814 = vrot.slane %v809, %v813
    %v824 = vunpack.c.l.b16 %v801
    %v825 = vunpack.c.l.b16 %v802
    %v826 = vunpack.c.l.b16 %v803
    %v827 = vunpack.c.l.b16 %v804
    %v828 = vunpack.c.l.b16 %v805
    %v829 = vunpack.c.l.b16 %v806
    %v830 = vunpack.c.l.b16 %v807
    %v831 = vunpack.c.l.b16 %v808
    %v832 = vpack.c.b16 %v825, %v824
    %v833 = vpack.c.b16 %v827, %v826
    %v834 = vpack.c.b16 %v829, %v828
    %v835 = vpack.c.b16 %v831, %v830
    %vm840 = vcmask 523264
    %v842 = vsel %vm840, %v800, 0
    %844 = vmatprep.subr.bf16.mxu0 0
    %845 = vmatpush1.bf16.msra.mxu0 %v832
    %846 = vmatprep.subr.bf16.mxu0 0
    %847 = vmatpush1.bf16.msra.mxu0 %v833
    %848 = vmatprep.subr.bf16.mxu0 0
    %849 = vmatpush1.bf16.msra.mxu0 %v834
    %850 = vmatprep.subr.bf16.mxu0 0
    %851 = vmatpush1.bf16.msra.mxu0 %v835
    %852 = vmatprep.subr.bf16.mxu0 0
    %853 = vmatpush1.bf16.msra.mxu0 0
    %854 = vmatprep.subr.bf16.mxu0 0
    %855 = vmatpush1.bf16.msra.mxu0 0
    %856 = vmatprep.subr.bf16.mxu0 0
    %857 = vmatpush1.bf16.msra.mxu0 0
    %858 = vmatprep.subr.bf16.mxu0 0
    %859 = vmatpush1.bf16.msra.mxu0 0
    %860 = vmatprep.subr.bf16.mxu0 0
    %861 = vmatpush1.bf16.msra.mxu0 0
    %862 = vmatprep.subr.bf16.mxu0 0
    %863 = vmatpush1.bf16.msra.mxu0 0
    %864 = vmatprep.subr.bf16.mxu0 0
    %865 = vmatpush1.bf16.msra.mxu0 0
    %866 = vmatprep.subr.bf16.mxu0 0
    %867 = vmatpush1.bf16.msra.mxu0 0
    %868 = vmatprep.subr.bf16.mxu0 0
    %869 = vmatpush1.bf16.msra.mxu0 0
    %870 = vmatprep.subr.bf16.mxu0 0
    %871 = vmatpush1.bf16.msra.mxu0 0
    %872 = vmatprep.subr.bf16.mxu0 0
    %873 = vmatpush1.bf16.msra.mxu0 0
    %874 = vmatprep.subr.bf16.mxu0 0
    %875 = vmatpush1.bf16.msra.mxu0 0
    %876 = vmatprep.mubr.bf16.mxu0 0
    %877 = vmatmul.mubr.bf16.gmra.mrb[0].mxu0 %v842
    %v878 = vpop.f32.mrb[0].mxu0
    %v879 = vadd.f32 %v814, %v878
    %v880 = vpop.f32.mrb[0].mxu0
    %v881 = vpop.f32.mrb[0].mxu0
    %v882 = vpop.f32.mrb[0].mxu0
    %883 = vdwg.mxu0
    %884 = vst [vmem:[#allocation5] sm:$0xff] %v879
    // Predicated region
    $region34: #{tpu_custom_call.1} parent=1 // pred_check
      _
    $region35: #{tpu_custom_call.1} parent=1 // pred_check_branch
      %886 = sbr.rel (0) target = $region37
    $region36: #{tpu_custom_call.1} parent=1 // pred_region
      %s888 = ssub.s32 128, 128
      %889 = vsyncadd [#allocation4], %s888
      %s891 = sshll.u32 [#allocation5], 4
      %s892 = int_to_ptr.vmem [resolvable:$true] %s891
      %894 = dma.vmem_to_hbm [thread:$0]  %s892, 128, %s7, [#allocation4]
    $region37: #{tpu_custom_call.1} parent=1 // pred_fallthru
      _
    // Predicated region
    $region38: #{tpu_custom_call.1} parent=1 // pred_check
      _
    $region39: #{tpu_custom_call.1} parent=1 // pred_check_branch
      %896 = sbr.rel (0) target = $region41
    $region40: #{tpu_custom_call.1} parent=1 // pred_region
      %897 = dma.done [#allocation4], 128
    $region41: #{tpu_custom_call.1} parent=1 // pred_fallthru
      _
    %898 = vsyncpa [#allocation3], 1
    %899 = vsyncpa [#allocation4], 1

</llo_original>
